<compile_context>
chip_gen: v6e
topology: v6e:2x2x1
jax: 0.10.0
libtpu: 0.0.40
codegen_flags: <defaults>
</compile_context>

<pallas_src>
import jax
import jax.numpy as jnp
from jax.experimental import pallas as pl
from jax.experimental.pallas import tpu as pltpu


# ---------------------------------------------------------------------------
# Config (mirrors GenomicModelConfig fields used by Encoder.__init__)
# ---------------------------------------------------------------------------
CONDITIONAL = True
X_DIM = 32
C_EMBEDDED = 8
ENCODER_DIMS = [64, 32]
Z_DIM = 16
BATCH = 16

LANE = 128
SUBLANE = 8


def _round_up(n, m):
    return ((n + m - 1) // m) * m


# ---------------------------------------------------------------------------
# Static packing layout: every layer (incl. the fused mu|logvar head) occupies a
# full (128, 128) block in one slab; biases live in one trailing 8-row block
# (row i = bias of layer i). All padding is zero, so padded lanes/rows never
# contribute to the result.
# ---------------------------------------------------------------------------
def _build_layout():
    init_dim = X_DIM + (C_EMBEDDED if CONDITIONAL else 0)
    dims = [init_dim] + ENCODER_DIMS + [2 * Z_DIM]        # last entry = fused head
    assert all(d <= LANE for d in dims), "full-lane packing assumes dims <= 128"
    layers = []
    row = 0
    for in_dim, out_dim in zip(dims[:-1], dims[1:]):
        layers.append((row, in_dim, out_dim))
        row += LANE                                        # full 128-row block
    bias_row = row
    row += _round_up(len(layers), SUBLANE)
    return layers, bias_row, row


_LAYERS, _BIAS_ROW, _TOTAL_ROWS = _build_layout()
_IN_FEAT = X_DIM + (C_EMBEDDED if CONDITIONAL else 0)


def prepare_params(params, dtype=jnp.bfloat16):
    """One-time packing of PyTorch-layout params into a single lane-dense slab."""
    ws = list(params["hidden_ws"]) + [
        jnp.concatenate([params["w_mu"], params["w_logvar"]], axis=0)]   # (2z, hidden)
    bs = list(params["hidden_bs"]) + [
        jnp.concatenate([params["b_mu"], params["b_logvar"]])]
    buf = jnp.zeros((_TOTAL_ROWS, LANE), dtype)
    for li, ((row, in_dim, out_dim), w, b) in enumerate(zip(_LAYERS, ws, bs)):
        buf = buf.at[row:row + in_dim, :out_dim].set(w.T.astype(dtype))
        buf = buf.at[_BIAS_ROW + li, :out_dim].set(b.astype(dtype))
    return buf


# ---------------------------------------------------------------------------
# Pallas kernel: full encoder forward for one batch tile.
# Every matmul is (tb, 128) x (128, 128); every load/store is full-vreg.
# ---------------------------------------------------------------------------
def _encoder_kernel(xc_ref, wb_ref, out_ref):
    wdt = wb_ref.dtype                      # bf16 by default, f32 if packed as f32
    h = xc_ref[...].astype(wdt)             # (tb, 128), lane-dense [x | c | 0...]
    n_layers = len(_LAYERS)
    for li, (row, _, _) in enumerate(_LAYERS):
        w = wb_ref[row:row + LANE, :]                                   # (128, 128)
        b = wb_ref[_BIAS_ROW + li:_BIAS_ROW + li + 1, :].astype(jnp.float32)  # (1,128)
        acc = jnp.dot(h, w, preferred_element_type=jnp.float32) + b    # f32 accum
        if li < n_layers - 1:
            h = jnp.maximum(acc, 0.0).astype(wdt)       # hidden: ReLU (f32), back to MXU dtype
        else:
            out_ref[...] = acc.astype(out_ref.dtype)    # fused [mu | logvar | 0], lane-dense store


# ---------------------------------------------------------------------------
# JAX wrapper: one grid step for small batches; "parallel" batch grid otherwise.
# ---------------------------------------------------------------------------
def _forward_impl(x, c, packed, batch_tile=512):
    batch = x.shape[0]

    # Fold x (and c) into one lane-dense (batch, 128) input: one cheap concat,
    # collapses layer 0 to a single full-width dot and removes the narrow c DMA.
    parts = [x, c] if CONDITIONAL else [x]
    parts.append(jnp.zeros((batch, LANE - _IN_FEAT), x.dtype))
    xc = jnp.concatenate(parts, axis=1)

    if batch <= batch_tile:
        tb = batch                      # single grid step, one TensorCore
        grid = (1,)
        semantics = ("arbitrary",)
    else:
        tb = _round_up(batch_tile, SUBLANE)
        grid = (pl.cdiv(batch, tb),)    # partial last tile handled by Pallas masking
        semantics = ("parallel",)

    flops = 2 * batch * len(_LAYERS) * LANE * LANE
    bytes_accessed = (_TOTAL_ROWS * LANE * packed.dtype.itemsize
                      + xc.size * xc.dtype.itemsize
                      + batch * LANE * 4)

    out = pl.pallas_call(
        _encoder_kernel,
        out_shape=jax.ShapeDtypeStruct((batch, LANE), jnp.float32),
        grid=grid,
        in_specs=[
            pl.BlockSpec((tb, LANE), lambda i: (i, 0)),
            pl.BlockSpec((_TOTAL_ROWS, LANE), lambda i: (0, 0)),   # resident weights
        ],
        out_specs=pl.BlockSpec((tb, LANE), lambda i: (i, 0)),
        compiler_params=pltpu.CompilerParams(dimension_semantics=semantics),
        cost_estimate=pl.CostEstimate(flops=flops, transcendentals=0,
                                      bytes_accessed=bytes_accessed),
    )(xc, packed)

    mu = out[:, :Z_DIM]
    logvar = out[:, Z_DIM:2 * Z_DIM]
    return mu, logvar


encoder_forward = jax.jit(_forward_impl, static_argnames=("batch_tile",))


# ---------------------------------------------------------------------------
# Deterministic parameter init (mimics nn.Linear default: U(-1/sqrt(in), +1/sqrt(in)))
# ---------------------------------------------------------------------------
def init_params(key):
    init_dim = X_DIM + (C_EMBEDDED if CONDITIONAL else 0)
    layers_dim = [init_dim] + ENCODER_DIMS

    params = {"hidden_ws": [], "hidden_bs": []}
    for in_dim, out_dim in zip(layers_dim[:-1], layers_dim[1:]):
        key, kw, kb = jax.random.split(key, 3)
        bound = 1.0 / jnp.sqrt(in_dim)
        params["hidden_ws"].append(
            jax.random.uniform(kw, (out_dim, in_dim), jnp.float32, -bound, bound))
        params["hidden_bs"].append(
            jax.random.uniform(kb, (out_dim,), jnp.float32, -bound, bound))

    last = layers_dim[-1]
    bound = 1.0 / jnp.sqrt(last)
    key, k1, k2, k3, k4 = jax.random.split(key, 5)
    params["w_mu"] = jax.random.uniform(k1, (Z_DIM, last), jnp.float32, -bound, bound)
    params["b_mu"] = jax.random.uniform(k2, (Z_DIM,), jnp.float32, -bound, bound)
    params["w_logvar"] = jax.random.uniform(k3, (Z_DIM, last), jnp.float32, -bound, bound)
    params["b_logvar"] = jax.random.uniform(k4, (Z_DIM,), jnp.float32, -bound, bound)
    return params


# ---------------------------------------------------------------------------
# Pure-JAX reference (matches the PyTorch forward exactly)
# ---------------------------------------------------------------------------
def encoder_reference(x, c, params):
    h = jnp.concatenate([x, c], axis=1) if CONDITIONAL else x
    for w, b in zip(params["hidden_ws"], params["hidden_bs"]):
        h = jnp.maximum(h @ w.T + b, 0.0)
    mu = h @ params["w_mu"].T + params["b_mu"]
    logvar = h @ params["w_logvar"].T + params["b_logvar"]
    return mu, logvar


if __name__ == "__main__":
    key = jax.random.PRNGKey(0)
    key, kx, kc, kp = jax.random.split(key, 4)

    x = jax.random.normal(kx, (BATCH, X_DIM), jnp.float32)
    c = jax.random.normal(kc, (BATCH, C_EMBEDDED), jnp.float32)
    params = init_params(kp)

    mu_ref, logvar_ref = encoder_reference(x, c, params)

    # f32 packing: kernel math matches the reference to tight tolerance.
    packed_f32 = jax.block_until_ready(prepare_params(params, dtype=jnp.float32))
    mu32, lv32 = jax.block_until_ready(encoder_forward(x, c, packed_f32))
    assert mu32.shape == (BATCH, Z_DIM) and lv32.shape == (BATCH, Z_DIM)
    assert jnp.allclose(mu32, mu_ref, atol=1e-4, rtol=1e-4)
    assert jnp.allclose(lv32, logvar_ref, atol=1e-4, rtol=1e-4)

    # bf16 packing (performance default): relaxed tolerance for bf16 weights/activations.
    packed_bf16 = jax.block_until_ready(prepare_params(params))
    mu, logvar = jax.block_until_ready(encoder_forward(x, c, packed_bf16))
    assert mu.shape == (BATCH, Z_DIM) and logvar.shape == (BATCH, Z_DIM)
    assert jnp.allclose(mu, mu_ref, atol=2e-2, rtol=2e-2)
    assert jnp.allclose(logvar, logvar_ref, atol=2e-2, rtol=2e-2)

    print("KERNEL_OK")
</pallas_src>

<mosaic_0001>
module attributes {stable_mosaic.version = 11 : i64} {
  func.func @_encoder_kernel(%arg0: i32, %arg1: memref<16x128xf32, #tpu.memory_space<vmem>>, %arg2: memref<392x128xf32, #tpu.memory_space<vmem>>, %arg3: memref<16x128xf32, #tpu.memory_space<vmem>>) attributes {dimension_semantics = [#tpu.dimension_semantics<arbitrary>], iteration_bounds = array<i64: 1>, scalar_prefetch = 0 : i64, scratch_operands = 0 : i64, tpu.core_type = #tpu.core_type<tc>, window_params = [{transform_indices = @transform_0, window_bounds = array<i64: 16, 128>}, {pipeline_mode = #tpu.pipeline_mode<synchronous>, transform_indices = @transform_1, window_bounds = array<i64: 392, 128>}, {transform_indices = @transform_2, window_bounds = array<i64: 16, 128>}]} {
    %c0 = arith.constant 0 : index
    %c0_0 = arith.constant 0 : index
    %0 = vector.load %arg1[%c0, %c0_0] : memref<16x128xf32, #tpu.memory_space<vmem>>, vector<16x128xf32>
    %c0_1 = arith.constant 0 : index
    %c0_2 = arith.constant 0 : index
    %1 = vector.load %arg2[%c0_1, %c0_2] : memref<392x128xf32, #tpu.memory_space<vmem>>, vector<128x128xf32>
    %c384 = arith.constant 384 : index
    %c0_3 = arith.constant 0 : index
    %2 = vector.load %arg2[%c384, %c0_3] : memref<392x128xf32, #tpu.memory_space<vmem>>, vector<1x128xf32>
    %cst = arith.constant dense<0.000000e+00> : vector<16x128xf32>
    %3 = tpu.matmul %0, %1, %cst {dimension_numbers = #tpu.dot_dimension_numbers<[1], [0], [0], [1], [0, 0, 1, 1], [], []>} : vector<16x128xf32>, vector<128x128xf32>, vector<16x128xf32> -> vector<16x128xf32>
    %4 = vector.broadcast %2 : vector<1x128xf32> to vector<16x128xf32>
    %5 = arith.addf %3, %4 : vector<16x128xf32>
    %cst_4 = arith.constant 0.000000e+00 : f32
    %6 = vector.broadcast %cst_4 : f32 to vector<16x128xf32>
    %7 = arith.maximumf %5, %6 : vector<16x128xf32>
    %c128 = arith.constant 128 : index
    %c0_5 = arith.constant 0 : index
    %8 = vector.load %arg2[%c128, %c0_5] : memref<392x128xf32, #tpu.memory_space<vmem>>, vector<128x128xf32>
    %c385 = arith.constant 385 : index
    %c0_6 = arith.constant 0 : index
    %9 = vector.load %arg2[%c385, %c0_6] : memref<392x128xf32, #tpu.memory_space<vmem>>, vector<1x128xf32>
    %cst_7 = arith.constant dense<0.000000e+00> : vector<16x128xf32>
    %10 = tpu.matmul %7, %8, %cst_7 {dimension_numbers = #tpu.dot_dimension_numbers<[1], [0], [0], [1], [0, 0, 1, 1], [], []>} : vector<16x128xf32>, vector<128x128xf32>, vector<16x128xf32> -> vector<16x128xf32>
    %11 = vector.broadcast %9 : vector<1x128xf32> to vector<16x128xf32>
    %12 = arith.addf %10, %11 : vector<16x128xf32>
    %cst_8 = arith.constant 0.000000e+00 : f32
    %13 = vector.broadcast %cst_8 : f32 to vector<16x128xf32>
    %14 = arith.maximumf %12, %13 : vector<16x128xf32>
    %c256 = arith.constant 256 : index
    %c0_9 = arith.constant 0 : index
    %15 = vector.load %arg2[%c256, %c0_9] : memref<392x128xf32, #tpu.memory_space<vmem>>, vector<128x128xf32>
    %c386 = arith.constant 386 : index
    %c0_10 = arith.constant 0 : index
    %16 = vector.load %arg2[%c386, %c0_10] : memref<392x128xf32, #tpu.memory_space<vmem>>, vector<1x128xf32>
    %cst_11 = arith.constant dense<0.000000e+00> : vector<16x128xf32>
    %17 = tpu.matmul %14, %15, %cst_11 {dimension_numbers = #tpu.dot_dimension_numbers<[1], [0], [0], [1], [0, 0, 1, 1], [], []>} : vector<16x128xf32>, vector<128x128xf32>, vector<16x128xf32> -> vector<16x128xf32>
    %18 = vector.broadcast %16 : vector<1x128xf32> to vector<16x128xf32>
    %19 = arith.addf %17, %18 : vector<16x128xf32>
    %c0_12 = arith.constant 0 : index
    %c0_13 = arith.constant 0 : index
    %20 = vector.load %arg3[%c0_12, %c0_13] : memref<16x128xf32, #tpu.memory_space<vmem>>, vector<16x128xf32>
    tpu.vector_store %arg3[%c0_12, %c0_13], %19 {strides = array<i32>} : memref<16x128xf32, #tpu.memory_space<vmem>>, vector<16x128xf32>,
    return
  }
  func.func @transform_0(%arg0: i32) -> (i32, i32) {
    %c0_i32 = arith.constant 0 : i32
    %c0_i32_0 = arith.constant 0 : i32
    return %arg0, %c0_i32 : i32, i32
  }
  func.func @transform_1(%arg0: i32) -> (i32, i32) {
    %c0_i32 = arith.constant 0 : i32
    %c0_i32_0 = arith.constant 0 : i32
    %c0_i32_1 = arith.constant 0 : i32
    return %c0_i32, %c0_i32_0 : i32, i32
  }
  func.func @transform_2(%arg0: i32) -> (i32, i32) {
    %c0_i32 = arith.constant 0 : i32
    %c0_i32_0 = arith.constant 0 : i32
    return %arg0, %c0_i32 : i32, i32
  }
}

</mosaic_0001>

<llo_original>
// kernel: _forward_impl.1
$region0: #{_forward_impl.1}
  #allocation0 [shape = 'u32[]', space=smem, size = 0x4, offset = 0x4, fixed_abs, tag = 'smem constant byte address 0x4 - core index']
  #allocation1 [shape = 'u32[144,128]{1,0:T(1,128)}', space=vmem, size = 0x12000, scoped, tag = 'internal scratch']
  %s0 = inlined_call_operand.vmem [shape: f32[16,128], index: 0, kind: input, shape index: {}]
  %s1 = inlined_call_operand.hbm [shape: f32[392,128], index: 1, kind: input, shape index: {}]
  %s2 = inlined_call_operand.vmem [shape: f32[16,128], index: 2, kind: output, shape index: {}]
  %s3 = sld [smem:[#allocation0]]
  $region22: #{_forward_impl.1} parent=0
    _
  %s5 = ssub.s32 1, %s3
  %s6 = scalar_select 0, %s5, %s3
  $region1: #{_forward_impl.1} parent=0
    #allocation2 [shape = 'u8[200704]{0}', space=vmem, size = 0x31000, scoped, tag = 'input window, operand 1, single buffered']
    #allocation3 [shape = 's32[1]{0}', space=sflag, size = 0x4, scoped, tag = 'scoped memory for _forward_impl.1']
    %7 = vsyncpa [#allocation3], 0
    // Predicated region
    $region2: #{_forward_impl.1} parent=1 // pred_check
      _
    $region3: #{_forward_impl.1} parent=1 // pred_check_branch
      %9 = sbr.rel (0) target = $region5
    $region4: #{_forward_impl.1} parent=1 // pred_region
      _
    $region5: #{_forward_impl.1} parent=1 // pred_fallthru
      _
    // Predicated region
    $region6: #{_forward_impl.1} parent=1 // pred_check
      _
    $region7: #{_forward_impl.1} parent=1 // pred_check_branch
      %11 = sbr.rel (0) target = $region9
    $region8: #{_forward_impl.1} parent=1 // pred_region
      %s13 = ssub.s32 6272, 6272
      %14 = vsyncadd [#allocation3], %s13
      %s15 = sshll.u32 [#allocation2], 4
      %s16 = int_to_ptr.vmem [resolvable:$true] %s15
      %21 = dma.hbm_to_vmem [thread:$0]  %s1, 6272, %s16, [#allocation3], 128, 128, 8
    $region9: #{_forward_impl.1} parent=1 // pred_fallthru
      _
    // Predicated region
    $region10: #{_forward_impl.1} parent=1 // pred_check
      _
    $region11: #{_forward_impl.1} parent=1 // pred_check_branch
      %23 = sbr.rel (0) target = $region13
    $region12: #{_forward_impl.1} parent=1 // pred_region
      %24 = dma.done [#allocation3], 6272
    $region13: #{_forward_impl.1} parent=1 // pred_fallthru
      _
    %v25 = vld [vmem:[%s0] sm:$0xff]
    %v26 = vld [vmem:[%s0 + $0x8] sm:$0xff]
    %v27 = vld [vmem:[#allocation2] sm:$0xff]
    %v28 = vld [vmem:[#allocation2 + $0x8] sm:$0xff]
    %v29 = vld [vmem:[#allocation2 + $0x10] sm:$0xff]
    %v30 = vld [vmem:[#allocation2 + $0x18] sm:$0xff]
    %v31 = vld [vmem:[#allocation2 + $0x20] sm:$0xff]
    %v32 = vld [vmem:[#allocation2 + $0x28] sm:$0xff]
    %v33 = vld [vmem:[#allocation2 + $0x30] sm:$0xff]
    %v34 = vld [vmem:[#allocation2 + $0x38] sm:$0xff]
    %v35 = vld [vmem:[#allocation2 + $0x40] sm:$0xff]
    %v36 = vld [vmem:[#allocation2 + $0x48] sm:$0xff]
    %v37 = vld [vmem:[#allocation2 + $0x50] sm:$0xff]
    %v38 = vld [vmem:[#allocation2 + $0x58] sm:$0xff]
    %v39 = vld [vmem:[#allocation2 + $0x60] sm:$0xff]
    %v40 = vld [vmem:[#allocation2 + $0x68] sm:$0xff]
    %v41 = vld [vmem:[#allocation2 + $0x70] sm:$0xff]
    %v42 = vld [vmem:[#allocation2 + $0x78] sm:$0xff]
    %v43 = vld [vmem:[#allocation2 + $0x180] sm:$0x1]
    %v44 = vlaneseq
    %v45 = vshrl.u32 %v44, 7
    %v46 = vsub.s32 0, %v45
    %v47 = vrot.slane %v43, %v46
    %48 = vmatprep.subr.mxu0 0.0
    %49 = vmatpush1.msra.mxu0 %v42
    %50 = vmatprep.subr.mxu0 0.0
    %51 = vmatpush1.msra.mxu0 %v41
    %52 = vmatprep.subr.mxu0 0.0
    %53 = vmatpush1.msra.mxu0 %v40
    %54 = vmatprep.subr.mxu0 0.0
    %55 = vmatpush1.msra.mxu0 %v39
    %56 = vmatprep.subr.mxu0 0.0
    %57 = vmatpush1.msra.mxu0 %v38
    %58 = vmatprep.subr.mxu0 0.0
    %59 = vmatpush1.msra.mxu0 %v37
    %60 = vmatprep.subr.mxu0 0.0
    %61 = vmatpush1.msra.mxu0 %v36
    %62 = vmatprep.subr.mxu0 0.0
    %63 = vmatpush1.msra.mxu0 %v35
    %64 = vmatprep.subr.mxu0 0.0
    %65 = vmatpush1.msra.mxu0 %v34
    %66 = vmatprep.subr.mxu0 0.0
    %67 = vmatpush1.msra.mxu0 %v33
    %68 = vmatprep.subr.mxu0 0.0
    %69 = vmatpush1.msra.mxu0 %v32
    %70 = vmatprep.subr.mxu0 0.0
    %71 = vmatpush1.msra.mxu0 %v31
    %72 = vmatprep.subr.mxu0 0.0
    %73 = vmatpush1.msra.mxu0 %v30
    %74 = vmatprep.subr.mxu0 0.0
    %75 = vmatpush1.msra.mxu0 %v29
    %76 = vmatprep.subr.mxu0 0.0
    %77 = vmatpush1.msra.mxu0 %v28
    %78 = vmatprep.subr.mxu0 0.0
    %79 = vmatpush1.msra.mxu0 %v27
    %80 = vmatprep.subr.mxu0 0.0
    %81 = vmatpush2.msra.mxu0 0.0
    %82 = vmatprep.subr.mxu0 0.0
    %83 = vmatpush2.msra.mxu0 0.0
    %84 = vmatprep.subr.mxu0 0.0
    %85 = vmatpush2.msra.mxu0 0.0
    %86 = vmatprep.subr.mxu0 0.0
    %87 = vmatpush2.msra.mxu0 0.0
    %88 = vmatprep.subr.mxu0 0.0
    %89 = vmatpush2.msra.mxu0 0.0
    %90 = vmatprep.subr.mxu0 0.0
    %91 = vmatpush2.msra.mxu0 0.0
    %92 = vmatprep.subr.mxu0 0.0
    %93 = vmatpush2.msra.mxu0 0.0
    %94 = vmatprep.subr.mxu0 0.0
    %95 = vmatpush2.msra.mxu0 0.0
    %96 = vmatprep.subr.mxu0 0.0
    %97 = vmatpush2.msra.mxu0 0.0
    %98 = vmatprep.subr.mxu0 0.0
    %99 = vmatpush2.msra.mxu0 0.0
    %100 = vmatprep.subr.mxu0 0.0
    %101 = vmatpush2.msra.mxu0 0.0
    %102 = vmatprep.subr.mxu0 0.0
    %103 = vmatpush2.msra.mxu0 0.0
    %104 = vmatprep.subr.mxu0 0.0
    %105 = vmatpush2.msra.mxu0 0.0
    %106 = vmatprep.subr.mxu0 0.0
    %107 = vmatpush2.msra.mxu0 0.0
    %108 = vmatprep.subr.mxu0 0.0
    %109 = vmatpush2.msra.mxu0 0.0
    %110 = vmatprep.subr.mxu0 0.0
    %111 = vmatpush2.msra.mxu0 0.0
    %112 = vmatprep.mubr.f32.mxu0 0.0
    %113 = vmatmul.mubr.f32.gmra.mxu0 %v25
    %v114 = vpop.f32.mrf.mxu0
    %v115 = vadd.f32 %v47, %v114
    %v116 = vpop.f32.mrf.mxu0
    %117 = vmatprep.mubr.f32.mxu0 0.0
    %118 = vmatmul.mubr.f32.gmra.mxu0 %v26
    %v119 = vpop.f32.mrf.mxu0
    %v120 = vadd.f32 %v47, %v119
    %v121 = vpop.f32.mrf.mxu0
    %122 = vdwg.mxu0
    %v123 = vmax.f32 %v115, 0.0
    %v124 = vmax.f32 %v120, 0.0
    %v125 = vld [vmem:[#allocation2 + $0x80] sm:$0xff]
    %v126 = vld [vmem:[#allocation2 + $0x88] sm:$0xff]
    %v127 = vld [vmem:[#allocation2 + $0x90] sm:$0xff]
    %v128 = vld [vmem:[#allocation2 + $0x98] sm:$0xff]
    %v129 = vld [vmem:[#allocation2 + $0xa0] sm:$0xff]
    %v130 = vld [vmem:[#allocation2 + $0xa8] sm:$0xff]
    %v131 = vld [vmem:[#allocation2 + $0xb0] sm:$0xff]
    %v132 = vld [vmem:[#allocation2 + $0xb8] sm:$0xff]
    %v133 = vld [vmem:[#allocation2 + $0xc0] sm:$0xff]
    %v134 = vld [vmem:[#allocation2 + $0xc8] sm:$0xff]
    %v135 = vld [vmem:[#allocation2 + $0xd0] sm:$0xff]
    %v136 = vld [vmem:[#allocation2 + $0xd8] sm:$0xff]
    %v137 = vld [vmem:[#allocation2 + $0xe0] sm:$0xff]
    %v138 = vld [vmem:[#allocation2 + $0xe8] sm:$0xff]
    %v139 = vld [vmem:[#allocation2 + $0xf0] sm:$0xff]
    %v140 = vld [vmem:[#allocation2 + $0xf8] sm:$0xff]
    %v141 = vld [vmem:[#allocation2 + $0x181] sm:$0x1]
    %v142 = vlaneseq
    %v143 = vshrl.u32 %v142, 7
    %v144 = vsub.s32 0, %v143
    %v145 = vrot.slane %v141, %v144
    %146 = vmatprep.subr.mxu0 0.0
    %147 = vmatpush1.msra.mxu0 %v140
    %148 = vmatprep.subr.mxu0 0.0
    %149 = vmatpush1.msra.mxu0 %v139
    %150 = vmatprep.subr.mxu0 0.0
    %151 = vmatpush1.msra.mxu0 %v138
    %152 = vmatprep.subr.mxu0 0.0
    %153 = vmatpush1.msra.mxu0 %v137
    %154 = vmatprep.subr.mxu0 0.0
    %155 = vmatpush1.msra.mxu0 %v136
    %156 = vmatprep.subr.mxu0 0.0
    %157 = vmatpush1.msra.mxu0 %v135
    %158 = vmatprep.subr.mxu0 0.0
    %159 = vmatpush1.msra.mxu0 %v134
    %160 = vmatprep.subr.mxu0 0.0
    %161 = vmatpush1.msra.mxu0 %v133
    %162 = vmatprep.subr.mxu0 0.0
    %163 = vmatpush1.msra.mxu0 %v132
    %164 = vmatprep.subr.mxu0 0.0
    %165 = vmatpush1.msra.mxu0 %v131
    %166 = vmatprep.subr.mxu0 0.0
    %167 = vmatpush1.msra.mxu0 %v130
    %168 = vmatprep.subr.mxu0 0.0
    %169 = vmatpush1.msra.mxu0 %v129
    %170 = vmatprep.subr.mxu0 0.0
    %171 = vmatpush1.msra.mxu0 %v128
    %172 = vmatprep.subr.mxu0 0.0
    %173 = vmatpush1.msra.mxu0 %v127
    %174 = vmatprep.subr.mxu0 0.0
    %175 = vmatpush1.msra.mxu0 %v126
    %176 = vmatprep.subr.mxu0 0.0
    %177 = vmatpush1.msra.mxu0 %v125
    %178 = vmatprep.subr.mxu0 0.0
    %179 = vmatpush2.msra.mxu0 0.0
    %180 = vmatprep.subr.mxu0 0.0
    %181 = vmatpush2.msra.mxu0 0.0
    %182 = vmatprep.subr.mxu0 0.0
    %183 = vmatpush2.msra.mxu0 0.0
    %184 = vmatprep.subr.mxu0 0.0
    %185 = vmatpush2.msra.mxu0 0.0
    %186 = vmatprep.subr.mxu0 0.0
    %187 = vmatpush2.msra.mxu0 0.0
    %188 = vmatprep.subr.mxu0 0.0
    %189 = vmatpush2.msra.mxu0 0.0
    %190 = vmatprep.subr.mxu0 0.0
    %191 = vmatpush2.msra.mxu0 0.0
    %192 = vmatprep.subr.mxu0 0.0
    %193 = vmatpush2.msra.mxu0 0.0
    %194 = vmatprep.subr.mxu0 0.0
    %195 = vmatpush2.msra.mxu0 0.0
    %196 = vmatprep.subr.mxu0 0.0
    %197 = vmatpush2.msra.mxu0 0.0
    %198 = vmatprep.subr.mxu0 0.0
    %199 = vmatpush2.msra.mxu0 0.0
    %200 = vmatprep.subr.mxu0 0.0
    %201 = vmatpush2.msra.mxu0 0.0
    %202 = vmatprep.subr.mxu0 0.0
    %203 = vmatpush2.msra.mxu0 0.0
    %204 = vmatprep.subr.mxu0 0.0
    %205 = vmatpush2.msra.mxu0 0.0
    %206 = vmatprep.subr.mxu0 0.0
    %207 = vmatpush2.msra.mxu0 0.0
    %208 = vmatprep.subr.mxu0 0.0
    %209 = vmatpush2.msra.mxu0 0.0
    %210 = vmatprep.mubr.f32.mxu0 0.0
    %211 = vmatmul.mubr.f32.gmra.mxu0 %v123
    %v212 = vpop.f32.mrf.mxu0
    %v213 = vadd.f32 %v145, %v212
    %v214 = vpop.f32.mrf.mxu0
    %215 = vmatprep.mubr.f32.mxu0 0.0
    %216 = vmatmul.mubr.f32.gmra.mxu0 %v124
    %v217 = vpop.f32.mrf.mxu0
    %v218 = vadd.f32 %v145, %v217
    %v219 = vpop.f32.mrf.mxu0
    %220 = vdwg.mxu0
    %v221 = vmax.f32 %v213, 0.0
    %v222 = vmax.f32 %v218, 0.0
    %v223 = vld [vmem:[#allocation2 + $0x100] sm:$0xff]
    %v224 = vld [vmem:[#allocation2 + $0x108] sm:$0xff]
    %v225 = vld [vmem:[#allocation2 + $0x110] sm:$0xff]
    %v226 = vld [vmem:[#allocation2 + $0x118] sm:$0xff]
    %v227 = vld [vmem:[#allocation2 + $0x120] sm:$0xff]
    %v228 = vld [vmem:[#allocation2 + $0x128] sm:$0xff]
    %v229 = vld [vmem:[#allocation2 + $0x130] sm:$0xff]
    %v230 = vld [vmem:[#allocation2 + $0x138] sm:$0xff]
    %v231 = vld [vmem:[#allocation2 + $0x140] sm:$0xff]
    %v232 = vld [vmem:[#allocation2 + $0x148] sm:$0xff]
    %v233 = vld [vmem:[#allocation2 + $0x150] sm:$0xff]
    %v234 = vld [vmem:[#allocation2 + $0x158] sm:$0xff]
    %v235 = vld [vmem:[#allocation2 + $0x160] sm:$0xff]
    %v236 = vld [vmem:[#allocation2 + $0x168] sm:$0xff]
    %v237 = vld [vmem:[#allocation2 + $0x170] sm:$0xff]
    %v238 = vld [vmem:[#allocation2 + $0x178] sm:$0xff]
    %v239 = vld [vmem:[#allocation2 + $0x182] sm:$0x1]
    %v240 = vlaneseq
    %v241 = vshrl.u32 %v240, 7
    %v242 = vsub.s32 0, %v241
    %v243 = vrot.slane %v239, %v242
    %244 = vmatprep.subr.mxu0 0.0
    %245 = vmatpush1.msra.mxu0 %v238
    %246 = vmatprep.subr.mxu0 0.0
    %247 = vmatpush1.msra.mxu0 %v237
    %248 = vmatprep.subr.mxu0 0.0
    %249 = vmatpush1.msra.mxu0 %v236
    %250 = vmatprep.subr.mxu0 0.0
    %251 = vmatpush1.msra.mxu0 %v235
    %252 = vmatprep.subr.mxu0 0.0
    %253 = vmatpush1.msra.mxu0 %v234
    %254 = vmatprep.subr.mxu0 0.0
    %255 = vmatpush1.msra.mxu0 %v233
    %256 = vmatprep.subr.mxu0 0.0
    %257 = vmatpush1.msra.mxu0 %v232
    %258 = vmatprep.subr.mxu0 0.0
    %259 = vmatpush1.msra.mxu0 %v231
    %260 = vmatprep.subr.mxu0 0.0
    %261 = vmatpush1.msra.mxu0 %v230
    %262 = vmatprep.subr.mxu0 0.0
    %263 = vmatpush1.msra.mxu0 %v229
    %264 = vmatprep.subr.mxu0 0.0
    %265 = vmatpush1.msra.mxu0 %v228
    %266 = vmatprep.subr.mxu0 0.0
    %267 = vmatpush1.msra.mxu0 %v227
    %268 = vmatprep.subr.mxu0 0.0
    %269 = vmatpush1.msra.mxu0 %v226
    %270 = vmatprep.subr.mxu0 0.0
    %271 = vmatpush1.msra.mxu0 %v225
    %272 = vmatprep.subr.mxu0 0.0
    %273 = vmatpush1.msra.mxu0 %v224
    %274 = vmatprep.subr.mxu0 0.0
    %275 = vmatpush1.msra.mxu0 %v223
    %276 = vmatprep.subr.mxu0 0.0
    %277 = vmatpush2.msra.mxu0 0.0
    %278 = vmatprep.subr.mxu0 0.0
    %279 = vmatpush2.msra.mxu0 0.0
    %280 = vmatprep.subr.mxu0 0.0
    %281 = vmatpush2.msra.mxu0 0.0
    %282 = vmatprep.subr.mxu0 0.0
    %283 = vmatpush2.msra.mxu0 0.0
    %284 = vmatprep.subr.mxu0 0.0
    %285 = vmatpush2.msra.mxu0 0.0
    %286 = vmatprep.subr.mxu0 0.0
    %287 = vmatpush2.msra.mxu0 0.0
    %288 = vmatprep.subr.mxu0 0.0
    %289 = vmatpush2.msra.mxu0 0.0
    %290 = vmatprep.subr.mxu0 0.0
    %291 = vmatpush2.msra.mxu0 0.0
    %292 = vmatprep.subr.mxu0 0.0
    %293 = vmatpush2.msra.mxu0 0.0
    %294 = vmatprep.subr.mxu0 0.0
    %295 = vmatpush2.msra.mxu0 0.0
    %296 = vmatprep.subr.mxu0 0.0
    %297 = vmatpush2.msra.mxu0 0.0
    %298 = vmatprep.subr.mxu0 0.0
    %299 = vmatpush2.msra.mxu0 0.0
    %300 = vmatprep.subr.mxu0 0.0
    %301 = vmatpush2.msra.mxu0 0.0
    %302 = vmatprep.subr.mxu0 0.0
    %303 = vmatpush2.msra.mxu0 0.0
    %304 = vmatprep.subr.mxu0 0.0
    %305 = vmatpush2.msra.mxu0 0.0
    %306 = vmatprep.subr.mxu0 0.0
    %307 = vmatpush2.msra.mxu0 0.0
    %308 = vmatprep.mubr.f32.mxu0 0.0
    %309 = vmatmul.mubr.f32.gmra.mxu0 %v221
    %v310 = vpop.f32.mrf.mxu0
    %v311 = vadd.f32 %v243, %v310
    %v312 = vpop.f32.mrf.mxu0
    %313 = vmatprep.mubr.f32.mxu0 0.0
    %314 = vmatmul.mubr.f32.gmra.mxu0 %v222
    %v315 = vpop.f32.mrf.mxu0
    %v316 = vadd.f32 %v243, %v315
    %v317 = vpop.f32.mrf.mxu0
    %318 = vdwg.mxu0
    %319 = vst [vmem:[%s2] sm:$0xff] %v311
    %320 = vst [vmem:[%s2 + $0x8] sm:$0xff] %v316
    // Predicated region
    $region14: #{_forward_impl.1} parent=1 // pred_check
      _
    $region15: #{_forward_impl.1} parent=1 // pred_check_branch
      %322 = sbr.rel (0) target = $region17
    $region16: #{_forward_impl.1} parent=1 // pred_region
      _
    $region17: #{_forward_impl.1} parent=1 // pred_fallthru
      _
    // Predicated region
    $region18: #{_forward_impl.1} parent=1 // pred_check
      _
    $region19: #{_forward_impl.1} parent=1 // pred_check_branch
      %324 = sbr.rel (0) target = $region21
    $region20: #{_forward_impl.1} parent=1 // pred_region
      _
    $region21: #{_forward_impl.1} parent=1 // pred_fallthru
      _
    %325 = vsyncpa [#allocation3], 1

</llo_original>
